<compile_context>
chip_gen: v6e
topology: v6e:2x2x1
jax: 0.10.0
libtpu: 0.0.40
codegen_flags: <defaults>
</compile_context>

<pallas_src>
import jax
import jax.numpy as jnp
from jax.experimental import pallas as pl
from jax.experimental.pallas import tpu as pltpu


# ----------------------------------------------------------------------------
# Fused kernel: non-local block + 1x1 conv ('CR') for one image / query tile.
# ----------------------------------------------------------------------------
def _up_fused_kernel(xk_ref, xq_ref, wk_ref, wq_ref, w2w_ref, o_ref):
    # xk_ref : (1, C+1, HW)  pixel-shuffled input (+ ones row), all key positions
    # xq_ref : (1, C+1, TQ)  same input, this step's query tile
    # wk_ref : (2*CP, C+1)   fused key-side weights  [phi_pad; g_pad]   (bias col folded)
    # wq_ref : (CP+Co, C+1)  fused query-side weights [theta_pad; w2|b_comb]
    # w2w_ref: (Co, CP)      w2 @ ww (non-local output conv folded through conv2)
    # o_ref  : (1, Co, TQ)
    f32 = jnp.float32
    bf16 = jnp.bfloat16
    cp = w2w_ref.shape[1]                                   # padded inter-channels (8)

    xk = xk_ref[0]                                          # (C+1, HW)  bf16
    xq = xq_ref[0]                                          # (C+1, TQ)  bf16

    # Key-side fused projections: [phi; g] = Wk @ x  (biases via the ones row).
    pk = jnp.dot(wk_ref[...], xk, preferred_element_type=f32)       # (2*CP, HW)
    phi = pk[:cp].astype(bf16)                                       # (CP, HW)
    g = pk[cp:].astype(bf16)                                         # (CP, HW)

    # Query-side fused projections: [theta; w2@x + b_comb] = Wq @ x_tile.
    pq = jnp.dot(wq_ref[...], xq, preferred_element_type=f32)       # (CP+Co, TQ)
    theta_t = jnp.transpose(pq[:cp]).astype(bf16)                    # (TQ, CP) small xpose
    w2x = pq[cp:]                                                    # (Co, TQ) f32

    # Attention logits: queries on sublanes, keys on lanes -> lane-wise softmax.
    logits = jnp.dot(theta_t, phi, preferred_element_type=f32)       # (TQ, HW)

    # Deferred-normalization softmax (flash trick): normalize the small result.
    mx = jnp.max(logits, axis=-1, keepdims=True)                     # (TQ, 1)
    e = jnp.exp(logits - mx)                                         # (TQ, HW) f32
    l = jnp.sum(e, axis=-1, keepdims=True)                           # (TQ, 1)

    # y_t[m, c] = sum_n e[m, n] * g[c, n]   ("A @ B^T": only small g relayouts)
    y_t = jax.lax.dot_general(e.astype(bf16), g, (((1,), (1,)), ((), ())),
                              preferred_element_type=f32)            # (TQ, CP)
    y_t = y_t * pl.reciprocal(l, approx=True)                        # softmax denom, EUP

    # out = relu(w2 @ (x + ww@y + bw) + b2) = relu(w2x + (w2@ww) @ y + b_comb)
    nl = jax.lax.dot_general(w2w_ref[...], y_t, (((1,), (1,)), ((), ())),
                             preferred_element_type=f32)             # (Co, TQ)
    o_ref[0] = jnp.maximum(w2x + nl, 0.0)                            # ReLU ('CR')


# ----------------------------------------------------------------------------
# Wrapper: PixelShuffle (layout glue), weight folding, single pallas_call.
# ----------------------------------------------------------------------------
def _pixel_shuffle_nchw(x, r):
    N, C, H, W = x.shape
    Cs = C // (r * r)
    x = x.reshape(N, Cs, r, r, H, W)
    x = jnp.transpose(x, (0, 1, 4, 2, 5, 3))
    return x.reshape(N, Cs, H * r, W * r)


def up_forward(params, x_nchw, up_factor=2):
    f32 = jnp.float32
    bf16 = jnp.bfloat16
    x = x_nchw.astype(f32)
    y = _pixel_shuffle_nchw(x, up_factor)                 # (N, Cs, 2H, 2W)
    N, Cs, Ho, Wo = y.shape
    HW = Ho * Wo
    TQ = 128 if HW % 128 == 0 else HW                     # query tile (lane-dense output)
    nq = HW // TQ

    wt, bt = params["wt"], params["bt"]
    wp, bp = params["wp"], params["bp"]
    wg, bg = params["wg"], params["bg"]
    ww, bw = params["ww"], params["bw"]
    w2, b2 = params["w2"], params["b2"]
    Ci = wt.shape[0]
    Co = w2.shape[0]
    CP = -(-Ci // 8) * 8                                  # pad inter-channels to sublane tile

    def pad_rows(w, b):                                   # (Ci, Cs) + bias -> (CP, Cs+1)
        wa = jnp.concatenate([w, b[:, None]], axis=1)
        return jnp.pad(wa, ((0, CP - Ci), (0, 0)))

    # Key-side fused weight: [phi; g]; query-side: [theta; w2 (+ folded bias)].
    w_keys = jnp.concatenate([pad_rows(wp, bp), pad_rows(wg, bg)], axis=0)     # (2CP, Cs+1)
    b_comb = w2 @ bw + b2                                  # fold ww-bias + conv2 bias
    w2_aug = jnp.concatenate([w2, b_comb[:, None]], axis=1)                    # (Co, Cs+1)
    w_query = jnp.concatenate([pad_rows(wt, bt), w2_aug], axis=0)              # (CP+Co, Cs+1)
    # Fold the non-local output 1x1 conv through conv2 (exact algebra).
    w2w = jnp.pad(w2 @ ww, ((0, 0), (0, CP - Ci)))                             # (Co, CP) f32

    # Input with a ones row appended (absorbs all biases into the matmuls).
    xe = jnp.concatenate([y.reshape(N, Cs, HW), jnp.ones((N, 1, HW), f32)],
                         axis=1).astype(bf16)                                  # (N, Cs+1, HW)
    C1 = Cs + 1
    w_keys_b = w_keys.astype(bf16)
    w_query_b = w_query.astype(bf16)

    out = pl.pallas_call(
        _up_fused_kernel,
        out_shape=jax.ShapeDtypeStruct((N, Co, HW), f32),
        grid=(N, nq),
        in_specs=[
            pl.BlockSpec((1, C1, HW), lambda n, q: (n, 0, 0)),   # keys: all positions
            pl.BlockSpec((1, C1, TQ), lambda n, q: (n, 0, q)),   # queries: this tile
            pl.BlockSpec(w_keys_b.shape, lambda n, q: (0, 0)),
            pl.BlockSpec(w_query_b.shape, lambda n, q: (0, 0)),
            pl.BlockSpec(w2w.shape, lambda n, q: (0, 0)),
        ],
        out_specs=pl.BlockSpec((1, Co, TQ), lambda n, q: (n, 0, q)),
        compiler_params=pltpu.CompilerParams(
            dimension_semantics=("parallel", "parallel")),
    )(xe, xe, w_keys_b, w_query_b, w2w)

    return out.reshape(N, Co, Ho, Wo)                      # already NCHW, no transpose


# ----------------------------------------------------------------------------
# Pure-JAX f32 reference (parity check for the bf16 / approx-recip kernel).
# ----------------------------------------------------------------------------
def up_forward_ref(params, x_nchw, up_factor=2):
    y = _pixel_shuffle_nchw(x_nchw.astype(jnp.float32), up_factor)
    N, Cs, Ho, Wo = y.shape
    xf = y.reshape(N, Cs, Ho * Wo)

    def c1x1(w, b, t):
        return jnp.einsum("oc,nch->noh", w, t) + b[None, :, None]

    th = c1x1(params["wt"], params["bt"], xf)
    ph = c1x1(params["wp"], params["bp"], xf)
    g = c1x1(params["wg"], params["bg"], xf)
    logits = jnp.einsum("ncm,nck->nmk", th, ph)
    attn = jax.nn.softmax(logits, axis=-1)
    yv = jnp.einsum("nck,nmk->ncm", g, attn)
    nl = xf + c1x1(params["ww"], params["bw"], yv)
    out = jnp.maximum(c1x1(params["w2"], params["b2"], nl), 0.0)
    return out.reshape(N, -1, Ho, Wo)


# ----------------------------------------------------------------------------
# Deterministic synthetic parameters (1x1 convs only).
# ----------------------------------------------------------------------------
def build_params(key, in_channels=64, out_channels=64, reduction=4):
    assert in_channels % 4 == 0
    c = in_channels // 4                    # channels after PixelShuffle(2)
    ci = max(c // reduction, 1)             # inter channels of the non-local block
    ks = jax.random.split(key, 10)

    def conv1x1(kw, kb, cin, cout):
        w = jax.random.normal(kw, (cout, cin), jnp.float32) / jnp.sqrt(float(cin))
        b = jax.random.normal(kb, (cout,), jnp.float32) * 0.01
        return w, b

    wt, bt = conv1x1(ks[0], ks[1], c, ci)           # theta
    wp, bp = conv1x1(ks[2], ks[3], c, ci)           # phi
    wg, bg = conv1x1(ks[4], ks[5], c, ci)           # g
    ww, bw = conv1x1(ks[6], ks[7], ci, c)           # non-local output conv
    w2, b2 = conv1x1(ks[8], ks[9], c, out_channels) # conv2 ('CR')
    return {"wt": wt, "bt": bt, "wp": wp, "bp": bp, "wg": wg, "bg": bg,
            "ww": ww, "bw": bw, "w2": w2, "b2": b2}


# ----------------------------------------------------------------------------
if __name__ == "__main__":
    key = jax.random.PRNGKey(0)
    k_params, k_data = jax.random.split(key)

    # Small shapes consistent with the module: in_channels % 4 == 0, upFactor=2.
    N, in_channels, out_channels, H, W = 2, 64, 64, 8, 8

    params = build_params(k_params, in_channels=in_channels,
                          out_channels=out_channels, reduction=4)
    x = jax.random.normal(k_data, (N, in_channels, H, W), jnp.float32)

    out = up_forward(params, x, up_factor=2)
    jax.block_until_ready(out)

    assert out.shape == (N, out_channels, 2 * H, 2 * W)
    assert bool(jnp.all(out >= 0.0))                 # final ReLU
    assert bool(jnp.all(jnp.isfinite(out)))

    ref = up_forward_ref(params, x, up_factor=2)
    rel = jnp.linalg.norm(out - ref) / (jnp.linalg.norm(ref) + 1e-6)
    assert float(rel) < 5e-2, f"relative error too large: {float(rel)}"

    print("KERNEL_OK")
</pallas_src>

<mosaic_0001>
module attributes {stable_mosaic.version = 11 : i64} {
  func.func @_up_fused_kernel(%arg0: i32, %arg1: i32, %arg2: memref<1x17x256xbf16, #tpu.memory_space<vmem>>, %arg3: memref<1x17x128xbf16, #tpu.memory_space<vmem>>, %arg4: memref<16x17xbf16, #tpu.memory_space<vmem>>, %arg5: memref<72x17xbf16, #tpu.memory_space<vmem>>, %arg6: memref<64x8xf32, #tpu.memory_space<vmem>>, %arg7: memref<1x64x128xf32, #tpu.memory_space<vmem>>) attributes {dimension_semantics = [#tpu.dimension_semantics<parallel>, #tpu.dimension_semantics<parallel>], iteration_bounds = array<i64: 2, 2>, scalar_prefetch = 0 : i64, scratch_operands = 0 : i64, tpu.core_type = #tpu.core_type<tc>, window_params = [{transform_indices = @transform_0, window_bounds = array<i64: 1, 17, 256>}, {transform_indices = @transform_1, window_bounds = array<i64: 1, 17, 128>}, {pipeline_mode = #tpu.pipeline_mode<synchronous>, transform_indices = @transform_2, window_bounds = array<i64: 16, 17>}, {pipeline_mode = #tpu.pipeline_mode<synchronous>, transform_indices = @transform_3, window_bounds = array<i64: 72, 17>}, {pipeline_mode = #tpu.pipeline_mode<synchronous>, transform_indices = @transform_4, window_bounds = array<i64: 64, 8>}, {transform_indices = @transform_5, window_bounds = array<i64: 1, 64, 128>}]} {
    %c0 = arith.constant 0 : index
    %c0_0 = arith.constant 0 : index
    %c0_1 = arith.constant 0 : index
    %0 = vector.load %arg2[%c0, %c0_0, %c0_1] : memref<1x17x256xbf16, #tpu.memory_space<vmem>>, vector<1x17x256xbf16>
    %1 = vector.shape_cast %0 : vector<1x17x256xbf16> to vector<17x256xbf16>
    %c0_2 = arith.constant 0 : index
    %c0_3 = arith.constant 0 : index
    %c0_4 = arith.constant 0 : index
    %2 = vector.load %arg3[%c0_2, %c0_3, %c0_4] : memref<1x17x128xbf16, #tpu.memory_space<vmem>>, vector<1x17x128xbf16>
    %3 = vector.shape_cast %2 : vector<1x17x128xbf16> to vector<17x128xbf16>
    %c0_5 = arith.constant 0 : index
    %c0_6 = arith.constant 0 : index
    %4 = vector.load %arg4[%c0_5, %c0_6] : memref<16x17xbf16, #tpu.memory_space<vmem>>, vector<16x17xbf16>
    %cst = arith.constant dense<0.000000e+00> : vector<16x256xf32>
    %5 = tpu.matmul %4, %1, %cst {dimension_numbers = #tpu.dot_dimension_numbers<[1], [0], [0], [1], [0, 0, 1, 1], [], []>} : vector<16x17xbf16>, vector<17x256xbf16>, vector<16x256xf32> -> vector<16x256xf32>
    %6 = vector.extract_strided_slice %5 {offsets = [0, 0], sizes = [8, 256], strides = [1, 1]} : vector<16x256xf32> to vector<8x256xf32>
    %7 = arith.truncf %6 : vector<8x256xf32> to vector<8x256xbf16>
    %8 = vector.extract_strided_slice %5 {offsets = [8, 0], sizes = [8, 256], strides = [1, 1]} : vector<16x256xf32> to vector<8x256xf32>
    %9 = arith.truncf %8 : vector<8x256xf32> to vector<8x256xbf16>
    %c0_7 = arith.constant 0 : index
    %c0_8 = arith.constant 0 : index
    %10 = vector.load %arg5[%c0_7, %c0_8] : memref<72x17xbf16, #tpu.memory_space<vmem>>, vector<72x17xbf16>
    %cst_9 = arith.constant dense<0.000000e+00> : vector<72x128xf32>
    %11 = tpu.matmul %10, %3, %cst_9 {dimension_numbers = #tpu.dot_dimension_numbers<[1], [0], [0], [1], [0, 0, 1, 1], [], []>} : vector<72x17xbf16>, vector<17x128xbf16>, vector<72x128xf32> -> vector<72x128xf32>
    %12 = vector.extract_strided_slice %11 {offsets = [0, 0], sizes = [8, 128], strides = [1, 1]} : vector<72x128xf32> to vector<8x128xf32>
    %13 = tpu.transpose %12, [1, 0] : vector<8x128xf32> -> vector<128x8xf32>
    %14 = arith.truncf %13 : vector<128x8xf32> to vector<128x8xbf16>
    %15 = vector.extract_strided_slice %11 {offsets = [8, 0], sizes = [64, 128], strides = [1, 1]} : vector<72x128xf32> to vector<64x128xf32>
    %cst_10 = arith.constant dense<0.000000e+00> : vector<128x256xf32>
    %16 = tpu.matmul %14, %7, %cst_10 {dimension_numbers = #tpu.dot_dimension_numbers<[1], [0], [0], [1], [0, 0, 1, 1], [], []>} : vector<128x8xbf16>, vector<8x256xbf16>, vector<128x256xf32> -> vector<128x256xf32>
    %cst_11 = arith.constant dense<0xFF800000> : vector<128xf32>
    %17 = vector.multi_reduction <maximumf>, %16, %cst_11 [1] : vector<128x256xf32> to vector<128xf32>
    %18 = vector.shape_cast %17 : vector<128xf32> to vector<128x1xf32>
    %19 = vector.broadcast %18 : vector<128x1xf32> to vector<128x256xf32>
    %20 = arith.subf %16, %19 : vector<128x256xf32>
    %21 = math.exp %20 : vector<128x256xf32>
    %cst_12 = arith.constant dense<0.000000e+00> : vector<128xf32>
    %22 = vector.multi_reduction <add>, %21, %cst_12 [1] : vector<128x256xf32> to vector<128xf32>
    %23 = vector.shape_cast %22 : vector<128xf32> to vector<128x1xf32>
    %24 = arith.truncf %21 : vector<128x256xf32> to vector<128x256xbf16>
    %cst_13 = arith.constant dense<0.000000e+00> : vector<128x8xf32>
    %25 = tpu.matmul %24, %9, %cst_13 {dimension_numbers = #tpu.dot_dimension_numbers<[1], [1], [0], [0], [0, 0, 1, 0], [], []>} : vector<128x256xbf16>, vector<8x256xbf16>, vector<128x8xf32> -> vector<128x8xf32>
    %26 = tpu.reciprocal %23 {approx = true} : vector<128x1xf32> -> vector<128x1xf32>
    %27 = vector.broadcast %26 : vector<128x1xf32> to vector<128x8xf32>
    %28 = arith.mulf %25, %27 : vector<128x8xf32>
    %c0_14 = arith.constant 0 : index
    %c0_15 = arith.constant 0 : index
    %29 = vector.load %arg6[%c0_14, %c0_15] : memref<64x8xf32, #tpu.memory_space<vmem>>, vector<64x8xf32>
    %cst_16 = arith.constant dense<0.000000e+00> : vector<64x128xf32>
    %30 = tpu.matmul %29, %28, %cst_16 {dimension_numbers = #tpu.dot_dimension_numbers<[1], [1], [0], [0], [0, 0, 1, 0], [], []>} : vector<64x8xf32>, vector<128x8xf32>, vector<64x128xf32> -> vector<64x128xf32>
    %31 = arith.addf %15, %30 : vector<64x128xf32>
    %cst_17 = arith.constant 0.000000e+00 : f32
    %32 = vector.broadcast %cst_17 : f32 to vector<64x128xf32>
    %33 = arith.maximumf %31, %32 : vector<64x128xf32>
    %c0_18 = arith.constant 0 : index
    %c0_19 = arith.constant 0 : index
    %c0_20 = arith.constant 0 : index
    %34 = vector.load %arg7[%c0_18, %c0_19, %c0_20] : memref<1x64x128xf32, #tpu.memory_space<vmem>>, vector<1x64x128xf32>
    %35 = vector.shape_cast %34 : vector<1x64x128xf32> to vector<64x128xf32>
    %36 = vector.shape_cast %33 : vector<64x128xf32> to vector<1x64x128xf32>
    tpu.vector_store %arg7[%c0_18, %c0_19, %c0_20], %36 {strides = array<i32>} : memref<1x64x128xf32, #tpu.memory_space<vmem>>, vector<1x64x128xf32>,
    return
  }
  func.func @transform_0(%arg0: i32, %arg1: i32) -> (i32, i32, i32) {
    %c0_i32 = arith.constant 0 : i32
    %c0_i32_0 = arith.constant 0 : i32
    %c0_i32_1 = arith.constant 0 : i32
    return %arg0, %c0_i32, %c0_i32_0 : i32, i32, i32
  }
  func.func @transform_1(%arg0: i32, %arg1: i32) -> (i32, i32, i32) {
    %c0_i32 = arith.constant 0 : i32
    %c0_i32_0 = arith.constant 0 : i32
    return %arg0, %c0_i32, %arg1 : i32, i32, i32
  }
  func.func @transform_2(%arg0: i32, %arg1: i32) -> (i32, i32) {
    %c0_i32 = arith.constant 0 : i32
    %c0_i32_0 = arith.constant 0 : i32
    %c0_i32_1 = arith.constant 0 : i32
    return %c0_i32, %c0_i32_0 : i32, i32
  }
  func.func @transform_3(%arg0: i32, %arg1: i32) -> (i32, i32) {
    %c0_i32 = arith.constant 0 : i32
    %c0_i32_0 = arith.constant 0 : i32
    %c0_i32_1 = arith.constant 0 : i32
    return %c0_i32, %c0_i32_0 : i32, i32
  }
  func.func @transform_4(%arg0: i32, %arg1: i32) -> (i32, i32) {
    %c0_i32 = arith.constant 0 : i32
    %c0_i32_0 = arith.constant 0 : i32
    %c0_i32_1 = arith.constant 0 : i32
    return %c0_i32, %c0_i32_0 : i32, i32
  }
  func.func @transform_5(%arg0: i32, %arg1: i32) -> (i32, i32, i32) {
    %c0_i32 = arith.constant 0 : i32
    %c0_i32_0 = arith.constant 0 : i32
    return %arg0, %c0_i32, %arg1 : i32, i32, i32
  }
}

</mosaic_0001>

<llo_original>
// kernel: tpu_custom_call.1
$region0: #{tpu_custom_call.1}
  #allocation0 [shape = 'u32[]', space=smem, size = 0x4, offset = 0x4, fixed_abs, tag = 'smem constant byte address 0x4 - core index']
  #allocation1 [shape = 'u32[144,128]{1,0:T(1,128)}', space=vmem, size = 0x12000, scoped, tag = 'internal scratch']
  %s0 = inlined_call_operand.vmem [shape: bf16[2,17,256], index: 0, kind: input, shape index: {}]
  %s1 = inlined_call_operand.vmem [shape: bf16[2,17,256], index: 1, kind: input, shape index: {}]
  %s2 = inlined_call_operand.vmem [shape: bf16[16,17], index: 2, kind: input, shape index: {}]
  %s3 = inlined_call_operand.vmem [shape: bf16[72,17], index: 3, kind: input, shape index: {}]
  %s4 = inlined_call_operand.vmem [shape: f32[64,8], index: 4, kind: input, shape index: {}]
  %s5 = inlined_call_operand.hbm [shape: f32[2,64,256], index: 5, kind: output, shape index: {}]
  %s6 = sld [smem:[#allocation0]]
  $region94: #{tpu_custom_call.1} parent=0
    _
  %s8 = ssub.s32 1, %s6
  %s9 = scalar_select 0, %s8, %s6
  $region1: #{tpu_custom_call.1} parent=0
    #allocation2 [shape = 'u8[12288]{0}', space=vmem, size = 0x3000, scoped, tag = 'input window, operand 1']
    #allocation3 [shape = 'u8[65536]{0}', space=vmem, size = 0x10000, scoped, tag = 'output window, operand 0']
    #allocation4 [shape = 's32[2]{0}', space=sflag, size = 0x8, scoped, tag = 'scoped memory for tpu_custom_call.1']
    %10 = vsyncpa [#allocation4], 0
    %s11 = scalar_lea.sflag [#allocation4], 1
    %12 = vsyncpa %s11, 0
    loop: start=0, step=1, limit=6
    $region2: #{tpu_custom_call.1} parent=1 // loop_pre_header
      _
    $region3: #{tpu_custom_call.1} parent=1 // loop_header
      %s14 = sphi 0, %s18
      %p15 = scmp.ge.s32.totalorder %s14, 6
      %s21 = sphi 0, %s33
      %s22 = sphi 0, %s29
      %s23 = sphi 0, %s21
      %s24 = sphi 0, %s22
      %s25 = sphi 0, %s23
      %s26 = sphi 0, %s24
      %s36 = sphi 0, %s38
      %s39 = sphi 0, %s36
      %s40 = sphi 0, %s39
      %s56 = sphi 0, %s40
      %s64 = sphi 0, %s66
      %s67 = sphi 0, %s64
      %s68 = sphi 0, %s67
      %s84 = sphi 0, %s68
      %s88 = sphi 0, %s88
      %s90 = sphi 0, %s88
      %s91 = sphi 0, %s90
      %s105 = sphi 0, %s91
      %s109 = sphi 0, %s109
      %s111 = sphi 0, %s109
      %s112 = sphi 0, %s111
      %s126 = sphi 0, %s112
      %s130 = sphi 0, %s130
      %s132 = sphi 0, %s130
      %s133 = sphi 0, %s132
      %s147 = sphi 0, %s133
      %s155 = sphi 0, %s157
      %s158 = sphi 0, %s155
      %s159 = sphi 0, %s158
      %s175 = sphi 0, %s159
    $region4: #{tpu_custom_call.1} parent=1 // loop_header_branch
      %17 = sbr.rel (%p15) target = $region8
    $region5: #{tpu_custom_call.1} parent=1 // loop_body
      %s19 = ssub.s32 %s14, 1
      %s20 = ssub.s32 %s14, 2
      %s27 = sadd.s32 1, %s22
      %p28 = scmp.ge.s32.totalorder %s27, 2
      %s29 = scalar_select %p28, 0, %s27
      %s30 = sadd.s32 1, %s21
      %s31 = scalar_select %p28, %s30, %s21
      %p32 = scmp.ge.s32.totalorder %s31, 2
      %s33 = scalar_select %p32, 0, %s31
      %s34 = ssub.s32 %s21, %s33
      %p35 = scmp.eq.s32.totalorder %s34, 0
      %s37 = sadd.s32 %s36, 1
      %s38 = scalar_select %p35, %s36, %s37
      %p41 = pneg %p35
      %p42 = scmp.eq.s32.totalorder %s14, 3
      %p43 = por %p41, %p42
      %p44 = scmp.ne.s32.totalorder %s36, %s39
      %p45 = scmp.eq.s32.totalorder %s14, 0
      %p46 = por %p44, %p45
      %p47 = scmp.ne.s32.totalorder %s36, %s39
      %p48 = scmp.eq.s32.totalorder %s19, 3
      %p49 = por %p47, %p48
      %p50 = scmp.ne.s32.totalorder %s39, %s40
      %p51 = scmp.eq.s32.totalorder %s19, 0
      %p52 = por %p50, %p51
      %p53 = scmp.ne.s32.totalorder %s39, %s40
      %p54 = scmp.eq.s32.totalorder %s20, 3
      %p55 = por %p53, %p54
      %p57 = scmp.ne.s32.totalorder %s40, %s56
      %p58 = scmp.eq.s32.totalorder %s20, 0
      %p59 = por %p57, %p58
      %s60 = ssub.s32 %s21, %s33
      %s61 = ssub.s32 %s22, %s29
      %s62 = sor.u32 %s60, %s61
      %p63 = scmp.eq.s32.totalorder %s62, 0
      %s65 = sadd.s32 %s64, 1
      %s66 = scalar_select %p63, %s64, %s65
      %p69 = pneg %p63
      %p70 = scmp.eq.s32.totalorder %s14, 3
      %p71 = por %p69, %p70
      %p72 = scmp.ne.s32.totalorder %s64, %s67
      %p73 = scmp.eq.s32.totalorder %s14, 0
      %p74 = por %p72, %p73
      %p75 = scmp.ne.s32.totalorder %s64, %s67
      %p76 = scmp.eq.s32.totalorder %s19, 3
      %p77 = por %p75, %p76
      %p78 = scmp.ne.s32.totalorder %s67, %s68
      %p79 = scmp.eq.s32.totalorder %s19, 0
      %p80 = por %p78, %p79
      %p81 = scmp.ne.s32.totalorder %s67, %s68
      %p82 = scmp.eq.s32.totalorder %s20, 3
      %p83 = por %p81, %p82
      %p85 = scmp.ne.s32.totalorder %s68, %s84
      %p86 = scmp.eq.s32.totalorder %s20, 0
      %p87 = por %p85, %p86
      %s89 = sadd.s32 %s88, 1
      %p92 = scmp.eq.s32.totalorder %s14, 3
      %p93 = scmp.ne.s32.totalorder %s88, %s90
      %p94 = scmp.eq.s32.totalorder %s14, 0
      %p95 = por %p93, %p94
      %p96 = scmp.ne.s32.totalorder %s88, %s90
      %p97 = scmp.eq.s32.totalorder %s19, 3
      %p98 = por %p96, %p97
      %p99 = scmp.ne.s32.totalorder %s90, %s91
      %p100 = scmp.eq.s32.totalorder %s19, 0
      %p101 = por %p99, %p100
      %p102 = scmp.ne.s32.totalorder %s90, %s91
      %p103 = scmp.eq.s32.totalorder %s20, 3
      %p104 = por %p102, %p103
      %p106 = scmp.ne.s32.totalorder %s91, %s105
      %p107 = scmp.eq.s32.totalorder %s20, 0
      %p108 = por %p106, %p107
      %s110 = sadd.s32 %s109, 1
      %p113 = scmp.eq.s32.totalorder %s14, 3
      %p114 = scmp.ne.s32.totalorder %s109, %s111
      %p115 = scmp.eq.s32.totalorder %s14, 0
      %p116 = por %p114, %p115
      %p117 = scmp.ne.s32.totalorder %s109, %s111
      %p118 = scmp.eq.s32.totalorder %s19, 3
      %p119 = por %p117, %p118
      %p120 = scmp.ne.s32.totalorder %s111, %s112
      %p121 = scmp.eq.s32.totalorder %s19, 0
      %p122 = por %p120, %p121
      %p123 = scmp.ne.s32.totalorder %s111, %s112
      %p124 = scmp.eq.s32.totalorder %s20, 3
      %p125 = por %p123, %p124
      %p127 = scmp.ne.s32.totalorder %s112, %s126
      %p128 = scmp.eq.s32.totalorder %s20, 0
      %p129 = por %p127, %p128
      %s131 = sadd.s32 %s130, 1
      %p134 = scmp.eq.s32.totalorder %s14, 3
      %p135 = scmp.ne.s32.totalorder %s130, %s132
      %p136 = scmp.eq.s32.totalorder %s14, 0
      %p137 = por %p135, %p136
      %p138 = scmp.ne.s32.totalorder %s130, %s132
      %p139 = scmp.eq.s32.totalorder %s19, 3
      %p140 = por %p138, %p139
      %p141 = scmp.ne.s32.totalorder %s132, %s133
      %p142 = scmp.eq.s32.totalorder %s19, 0
      %p143 = por %p141, %p142
      %p144 = scmp.ne.s32.totalorder %s132, %s133
      %p145 = scmp.eq.s32.totalorder %s20, 3
      %p146 = por %p144, %p145
      %p148 = scmp.ne.s32.totalorder %s133, %s147
      %p149 = scmp.eq.s32.totalorder %s20, 0
      %p150 = por %p148, %p149
      %s151 = ssub.s32 %s21, %s33
      %s152 = ssub.s32 %s22, %s29
      %s153 = sor.u32 %s151, %s152
      %p154 = scmp.eq.s32.totalorder %s153, 0
      %s156 = sadd.s32 %s155, 1
      %s157 = scalar_select %p154, %s155, %s156
      %p160 = pneg %p154
      %p161 = scmp.eq.s32.totalorder %s14, 3
      %p162 = por %p160, %p161
      %p163 = scmp.ne.s32.totalorder %s155, %s158
      %p164 = scmp.eq.s32.totalorder %s14, 0
      %p165 = por %p163, %p164
      %p166 = scmp.ne.s32.totalorder %s155, %s158
      %p167 = scmp.eq.s32.totalorder %s19, 3
      %p168 = por %p166, %p167
      %p169 = scmp.ne.s32.totalorder %s158, %s159
      %p170 = scmp.eq.s32.totalorder %s19, 0
      %p171 = por %p169, %p170
      %p172 = scmp.ne.s32.totalorder %s158, %s159
      %p173 = scmp.eq.s32.totalorder %s20, 3
      %p174 = por %p172, %p173
      %p176 = scmp.ne.s32.totalorder %s159, %s175
      %p177 = scmp.eq.s32.totalorder %s20, 0
      %p178 = por %p176, %p177
      %p179 = scmp.le.s32.totalorder 1, %s14
      %p180 = scmp.lt.s32.totalorder %s14, 5
      %p181 = pnand %p179, %p180
      %p182 = pneg %p181
      // Predicated region
      $region9: #{tpu_custom_call.1} parent=5 // pred_check
        _
      $region10: #{tpu_custom_call.1} parent=5 // pred_check_branch
        %184 = sbr.rel (%p181) target = $region12
      $region11: #{tpu_custom_call.1} parent=5 // pred_region
        %s185 = ssub.s32 %s14, 1
        // Predicated region
        $region13: #{tpu_custom_call.1} parent=11 // pred_check
          %p186 = pneg %p101
        $region14: #{tpu_custom_call.1} parent=11 // pred_check_branch
          %188 = sbr.rel (%p186) target = $region16
        $region15: #{tpu_custom_call.1} parent=11 // pred_region
          _
        $region16: #{tpu_custom_call.1} parent=11 // pred_fallthru
          _
        // Predicated region
        $region17: #{tpu_custom_call.1} parent=11 // pred_check
          %p189 = pneg %p122
        $region18: #{tpu_custom_call.1} parent=11 // pred_check_branch
          %191 = sbr.rel (%p189) target = $region20
        $region19: #{tpu_custom_call.1} parent=11 // pred_region
          _
        $region20: #{tpu_custom_call.1} parent=11 // pred_fallthru
          _
        // Predicated region
        $region21: #{tpu_custom_call.1} parent=11 // pred_check
          %p192 = pneg %p143
        $region22: #{tpu_custom_call.1} parent=11 // pred_check_branch
          %194 = sbr.rel (%p192) target = $region24
        $region23: #{tpu_custom_call.1} parent=11 // pred_region
          _
        $region24: #{tpu_custom_call.1} parent=11 // pred_fallthru
          _
      $region12: #{tpu_custom_call.1} parent=5 // pred_fallthru
        _
      %p195 = scmp.lt.s32.totalorder %s14, 4
      // Predicated region
      $region25: #{tpu_custom_call.1} parent=5 // pred_check
        %p196 = pneg %p195
      $region26: #{tpu_custom_call.1} parent=5 // pred_check_branch
        %198 = sbr.rel (%p196) target = $region28
      $region27: #{tpu_custom_call.1} parent=5 // pred_region
        // Predicated region
        $region29: #{tpu_custom_call.1} parent=27 // pred_check
          %p199 = pneg %p46
        $region30: #{tpu_custom_call.1} parent=27 // pred_check_branch
          %201 = sbr.rel (%p199) target = $region32
        $region31: #{tpu_custom_call.1} parent=27 // pred_region
          %p202 = scmp.lt.s32.totalorder %s21, 1
          %s203 = scalar_select %p202, %s21, 1
          %s204 = smul.addr %s203, 6
          %s205 = smul.addr %s204, 4
          %s206 = scalar_lea.vmem %s0, %s205
        $region32: #{tpu_custom_call.1} parent=27 // pred_fallthru
          _
        // Predicated region
        $region33: #{tpu_custom_call.1} parent=27 // pred_check
          %p207 = pneg %p74
        $region34: #{tpu_custom_call.1} parent=27 // pred_check_branch
          %209 = sbr.rel (%p207) target = $region36
        $region35: #{tpu_custom_call.1} parent=27 // pred_region
          %s210 = sand.u32 %s64, 1
          %s211 = sand.u32 %s64, 1
          %s212 = smul.addr %s211, 12
          %s213 = scalar_lea.vmem [#allocation2], %s212
          %s214 = smul.addr %s21, 6
          %s215 = sadd.s32 %s22, %s214
          %s216 = smul.addr %s215, 4
          %s217 = scalar_lea.vmem %s1, %s216
          // Predicated region
          $region37: #{tpu_custom_call.1} parent=35 // pred_check
            _
          $region38: #{tpu_custom_call.1} parent=35 // pred_check_branch
            %219 = sbr.rel (0) target = $region40
          $region39: #{tpu_custom_call.1} parent=35 // pred_region
            // Predicated region
            $region41: #{tpu_custom_call.1} parent=39 // pred_check
              _
            $region42: #{tpu_custom_call.1} parent=39 // pred_check_branch
              %221 = sbr.rel target = $region44
            $region43: #{tpu_custom_call.1} parent=39 // pred_region
              // Predicated region
              $region56: #{tpu_custom_call.1} parent=43 // pred_check
                _
              $region57: #{tpu_custom_call.1} parent=43 // pred_check_branch
                %241 = sbr.rel (0) target = $region59
              $region58: #{tpu_custom_call.1} parent=43 // pred_region
                loop: start=0, step=1, limit=1
                $region60: #{tpu_custom_call.1} parent=58 // loop_pre_header
                  _
                $region61: #{tpu_custom_call.1} parent=58 // loop_header
                  %s243 = sphi 0, %s247
                  %p244 = scmp.ge.s32.totalorder %s243, 1
                  %s248 = sphi %s217, %s217
                  %s249 = sphi %s213, %s213
                $region62: #{tpu_custom_call.1} parent=58 // loop_header_branch
                  %246 = sbr.rel (%p244) target = $region66
                $region63: #{tpu_custom_call.1} parent=58 // loop_body
                  _
                $region64: #{tpu_custom_call.1} parent=58 // loop_footer
                  %s247 = sadd.s32 1, %s243
                $region65: #{tpu_custom_call.1} parent=58 // loop_footer_branch
                  %242 = sbr.rel target = $region61
                $region66: #{tpu_custom_call.1} parent=58 // loop_exit
                  _
                %s251 = ssub.s32 16, 1
                loop: start=0, step=1, limit=1
                $region67: #{tpu_custom_call.1} parent=58 // loop_pre_header
                  _
                $region68: #{tpu_custom_call.1} parent=58 // loop_header
                  %s253 = sphi 0, %s257
                  %p254 = scmp.ge.s32.totalorder %s253, 1
                  %s258 = sphi %s217, %s217
                  %s259 = sphi %s213, %s213
                $region69: #{tpu_custom_call.1} parent=58 // loop_header_branch
                  %256 = sbr.rel (%p254) target = $region73
                $region70: #{tpu_custom_call.1} parent=58 // loop_body
                  %v260 = vld [vmem:[%s258] sm:%s251]
                  %261 = vst [vmem:[%s259] sm:%s251] %v260
                  %v262 = vld [vmem:[%s258 + $0x8] sm:%s251]
                  %263 = vst [vmem:[%s259 + $0x4] sm:%s251] %v262
                  %v264 = vld [vmem:[%s258 + $0x10] sm:%s251]
                  %265 = vst [vmem:[%s259 + $0x8] sm:%s251] %v264
                $region71: #{tpu_custom_call.1} parent=58 // loop_footer
                  %s257 = sadd.s32 1, %s253
                $region72: #{tpu_custom_call.1} parent=58 // loop_footer_branch
                  %252 = sbr.rel target = $region68
                $region73: #{tpu_custom_call.1} parent=58 // loop_exit
                  _
              $region59: #{tpu_custom_call.1} parent=43 // pred_fallthru
                _
            $region44: #{tpu_custom_call.1} parent=39 // pred_fallthru
              _
            // Predicated region
            $region45: #{tpu_custom_call.1} parent=39 // pred_check
              _
            $region46: #{tpu_custom_call.1} parent=39 // pred_check_branch
              %223 = sbr.rel (0) target = $region48
            $region47: #{tpu_custom_call.1} parent=39 // pred_region
              %s225 = ssub.s32 16, 1
              loop: start=0, step=1, limit=1
              $region49: #{tpu_custom_call.1} parent=47 // loop_pre_header
                _
              $region50: #{tpu_custom_call.1} parent=47 // loop_header
                %s227 = sphi 0, %s231
                %p228 = scmp.ge.s32.totalorder %s227, 1
                %s232 = sphi %s217, %s217
                %s233 = sphi %s213, %s213
              $region51: #{tpu_custom_call.1} parent=47 // loop_header_branch
                %230 = sbr.rel (%p228) target = $region55
              $region52: #{tpu_custom_call.1} parent=47 // loop_body
                %v234 = vld [vmem:[%s232] sm:%s225]
                %235 = vst [vmem:[%s233] sm:%s225] %v234
                %v236 = vld [vmem:[%s232 + $0x8] sm:%s225]
                %237 = vst [vmem:[%s233 + $0x4] sm:%s225] %v236
                %v238 = vld [vmem:[%s232 + $0x10] sm:%s225]
                %239 = vst [vmem:[%s233 + $0x8] sm:%s225] %v238
              $region53: #{tpu_custom_call.1} parent=47 // loop_footer
                %s231 = sadd.s32 1, %s227
              $region54: #{tpu_custom_call.1} parent=47 // loop_footer_branch
                %226 = sbr.rel target = $region50
              $region55: #{tpu_custom_call.1} parent=47 // loop_exit
                _
            $region48: #{tpu_custom_call.1} parent=39 // pred_fallthru
              _
          $region40: #{tpu_custom_call.1} parent=35 // pred_fallthru
            _
          %266 = vnop
        $region36: #{tpu_custom_call.1} parent=27 // pred_fallthru
          _
      $region28: #{tpu_custom_call.1} parent=5 // pred_fallthru
        _
      %p267 = scmp.le.s32.totalorder 1, %s14
      %p268 = scmp.lt.s32.totalorder %s14, 5
      %p269 = pnand %p267, %p268
      %p270 = pneg %p269
      // Predicated region
      $region74: #{tpu_custom_call.1} parent=5 // pred_check
        _
      $region75: #{tpu_custom_call.1} parent=5 // pred_check_branch
        %272 = sbr.rel (%p269) target = $region77
      $region76: #{tpu_custom_call.1} parent=5 // pred_region
        %s273 = ssub.s32 %s14, 1
        %s274 = sand.u32 %s67, 1
        %s275 = sand.u32 %s67, 1
        %s276 = smul.addr %s275, 12
        %s277 = scalar_lea.vmem [#allocation2], %s276
        // Predicated region
        $region78: #{tpu_custom_call.1} parent=76 // pred_check
          %p278 = pneg %p80
        $region79: #{tpu_custom_call.1} parent=76 // pred_check_branch
          %280 = sbr.rel (%p278) target = $region81
        $region80: #{tpu_custom_call.1} parent=76 // pred_region
          _
        $region81: #{tpu_custom_call.1} parent=76 // pred_fallthru
          _
        %p281 = scmp.lt.s32.totalorder %s23, 1
        %s282 = scalar_select %p281, %s23, 1
        %s283 = smul.addr %s282, 6
        %s284 = smul.addr %s283, 4
        %s285 = scalar_lea.vmem %s0, %s284
        %p286 = pneg %p52
        %p287 = pneg %p49
        %s288 = sand.u32 %s67, 1
        %s289 = sand.u32 %s67, 1
        %s290 = smul.addr %s289, 12
        %s291 = scalar_lea.vmem [#allocation2], %s290
        %p292 = pneg %p80
        %p293 = pneg %p77
        %p294 = pneg %p101
        %p295 = pneg %p98
        %p296 = pneg %p122
        %p297 = pneg %p119
        %p298 = pneg %p143
        %p299 = pneg %p140
        %p300 = pneg %p171
        %p301 = pneg %p168
        %s302 = sand.u32 %s158, 1
        %s303 = scalar_lea.sflag [#allocation4], %s302
        %s304 = sand.u32 %s158, 1
        %s305 = smul.addr %s304, 64
        %s306 = scalar_lea.vmem [#allocation3], %s305
        %p307 = scmp.lt.s32.totalorder %s23, 1
        %s308 = scalar_select %p307, %s23, 1
        %s309 = smul.addr %s308, 6
        %s310 = smul.addr %s309, 4
        %s311 = scalar_lea.vmem %s0, %s310
        %v313 = vld [vmem:[%s311] sm:$0xff]
        %v314 = vld [vmem:[%s311 + $0x8] sm:$0xff]
        %v315 = vld [vmem:[%s311 + $0x10] sm:$0x11]
        %v316 = vld [vmem:[%s277] sm:$0xf]
        %v317 = vld [vmem:[%s277 + $0x4] sm:$0xf]
        %v318 = vld [vmem:[%s277 + $0x8] sm:$0x1]
        %v319 = vld [vmem:[%s2] sm:$0xf]
        %v320 = vld [vmem:[%s2 + $0x4] sm:$0xf]
        %v323 = vunpack.c.l.b16 %v319
        %v324 = vunpack.c.l.b16 %v320
        %v325 = vpack.c.b16 %v324, %v323
        %v329 = vunpack.c.l.b16 %v313
        %v330 = vunpack.c.h.b16 %v313
        %v331 = vunpack.c.l.b16 %v314
        %v332 = vunpack.c.h.b16 %v314
        %v333 = vunpack.c.l.b16 %v315
        %v334 = vunpack.c.h.b16 %v315
        %v335 = vpack.c.b16 %v331, %v329
        %v336 = vpack.c.b16 %v332, %v330
        %v337 = vpack.c.b16 %v333, %v333
        %v338 = vpack.c.b16 %v334, %v334
        %vm341 = vcmask 138240
        %v343 = vsel %vm341, %v325, 0
        %vm345 = vcmask 1040384
        %v346 = vsel 0, 4294967295, 65535
        %v347 = vsel %vm345, %v346, 0
        %v349 = vand.u32 %v337, %v347
        %v352 = vand.u32 %v338, %v347
        %354 = vmatprep.subr.bf16.mxu0 0
        %355 = vmatpush1.bf16.msra.mxu0 0
        %356 = vmatprep.subr.bf16.mxu0 0
        %357 = vmatpush1.bf16.msra.mxu0 0
        %358 = vmatprep.subr.bf16.mxu0 0
        %359 = vmatpush1.bf16.msra.mxu0 0
        %360 = vmatprep.subr.bf16.mxu0 0
        %361 = vmatpush1.bf16.msra.mxu0 0
        %362 = vmatprep.subr.bf16.mxu0 0
        %363 = vmatpush1.bf16.msra.mxu0 0
        %364 = vmatprep.subr.bf16.mxu0 0
        %365 = vmatpush1.bf16.msra.mxu0 0
        %366 = vmatprep.subr.bf16.mxu0 %v352
        %367 = vmatpush1.bf16.msra.mxu0 %v349
        %368 = vmatprep.subr.bf16.mxu0 %v336
        %369 = vmatpush1.bf16.msra.mxu0 %v335
        %370 = vmatprep.subr.bf16.mxu0 0
        %371 = vmatpush2.bf16.msra.mxu0 0
        %372 = vmatprep.subr.bf16.mxu0 0
        %373 = vmatpush2.bf16.msra.mxu0 0
        %374 = vmatprep.subr.bf16.mxu0 0
        %375 = vmatpush2.bf16.msra.mxu0 0
        %376 = vmatprep.subr.bf16.mxu0 0
        %377 = vmatpush2.bf16.msra.mxu0 0
        %378 = vmatprep.subr.bf16.mxu0 0
        %379 = vmatpush2.bf16.msra.mxu0 0
        %380 = vmatprep.subr.bf16.mxu0 0
        %381 = vmatpush2.bf16.msra.mxu0 0
        %382 = vmatprep.subr.bf16.mxu0 0
        %383 = vmatpush2.bf16.msra.mxu0 0
        %384 = vmatprep.subr.bf16.mxu0 0
        %385 = vmatpush2.bf16.msra.mxu0 0
        %386 = vmatprep.mubr.bf16.mxu0 0
        %387 = vmatmul.mubr.bf16.gmra.mxu0 %v343
        %v388 = vpop.f32.mrf.mxu0
        %v389 = vadd.f32 0.0, %v388
        %v390 = vpop.f32.mrf.mxu0
        %v391 = vadd.f32 0.0, %v390
        %v392 = vpop.f32.mrf.mxu0
        %v393 = vadd.f32 0.0, %v392
        %v394 = vpop.f32.mrf.mxu0
        %v395 = vadd.f32 0.0, %v394
        %396 = vdwg.mxu0
        %v397 = vpack.c.bf16 %v389, %v389
        %v398 = vpack.c.bf16 %v391, %v391
        %v399 = vpack.c.bf16 %v393, %v393
        %v400 = vpack.c.bf16 %v395, %v395
        %v401 = vld [vmem:[%s3] sm:$0xf]
        %v402 = vld [vmem:[%s3 + $0x4] sm:$0xf]
        %v403 = vld [vmem:[%s3 + $0x8] sm:$0xf]
        %v404 = vld [vmem:[%s3 + $0xc] sm:$0xf]
        %v405 = vld [vmem:[%s3 + $0x10] sm:$0xf]
        %v406 = vld [vmem:[%s3 + $0x14] sm:$0xf]
        %v407 = vld [vmem:[%s3 + $0x18] sm:$0xf]
        %v408 = vld [vmem:[%s3 + $0x1c] sm:$0xf]
        %v409 = vld [vmem:[%s3 + $0x20] sm:$0xf]
        %v419 = vunpack.c.l.b16 %v401
        %v420 = vunpack.c.l.b16 %v402
        %v421 = vunpack.c.l.b16 %v403
        %v422 = vunpack.c.l.b16 %v404
        %v423 = vunpack.c.l.b16 %v405
        %v424 = vunpack.c.l.b16 %v406
        %v425 = vunpack.c.l.b16 %v407
        %v426 = vunpack.c.l.b16 %v408
        %v427 = vunpack.c.l.b16 %v409
        %v428 = vpack.c.b16 %v420, %v419
        %v429 = vpack.c.b16 %v422, %v421
        %v430 = vpack.c.b16 %v424, %v423
        %v431 = vpack.c.b16 %v426, %v425
        %v432 = vpack.c.b16 %v427, %v427
        %v436 = vunpack.c.l.b16 %v316
        %v437 = vunpack.c.l.b16 %v317
        %v438 = vunpack.c.l.b16 %v318
        %v439 = vpack.c.b16 %v437, %v436
        %v440 = vpack.c.b16 %v438, %v438
        %v443 = vsel %vm341, %v428, 0
        %v446 = vsel %vm341, %v429, 0
        %v449 = vsel %vm341, %v430, 0
        %v452 = vsel %vm341, %v431, 0
        %v455 = vsel %vm341, %v432, 0
        %v458 = vand.u32 %v440, %v347
        %460 = vmatprep.subr.bf16.mxu0 0
        %461 = vmatpush1.bf16.msra.mxu0 0
        %462 = vmatprep.subr.bf16.mxu0 0
        %463 = vmatpush1.bf16.msra.mxu0 0
        %464 = vmatprep.subr.bf16.mxu0 0
        %465 = vmatpush1.bf16.msra.mxu0 0
        %466 = vmatprep.subr.bf16.mxu0 0
        %467 = vmatpush1.bf16.msra.mxu0 0
        %468 = vmatprep.subr.bf16.mxu0 0
        %469 = vmatpush1.bf16.msra.mxu0 0
        %470 = vmatprep.subr.bf16.mxu0 0
        %471 = vmatpush1.bf16.msra.mxu0 0
        %472 = vmatprep.subr.bf16.mxu0 0
        %473 = vmatpush1.bf16.msra.mxu0 %v458
        %474 = vmatprep.subr.bf16.mxu0 0
        %475 = vmatpush1.bf16.msra.mxu0 %v439
        %476 = vmatprep.subr.bf16.mxu0 0
        %477 = vmatpush2.bf16.msra.mxu0 0
        %478 = vmatprep.subr.bf16.mxu0 0
        %479 = vmatpush2.bf16.msra.mxu0 0
        %480 = vmatprep.subr.bf16.mxu0 0
        %481 = vmatpush2.bf16.msra.mxu0 0
        %482 = vmatprep.subr.bf16.mxu0 0
        %483 = vmatpush2.bf16.msra.mxu0 0
        %484 = vmatprep.subr.bf16.mxu0 0
        %485 = vmatpush2.bf16.msra.mxu0 0
        %486 = vmatprep.subr.bf16.mxu0 0
        %487 = vmatpush2.bf16.msra.mxu0 0
        %488 = vmatprep.subr.bf16.mxu0 0
        %489 = vmatpush2.bf16.msra.mxu0 0
        %490 = vmatprep.subr.bf16.mxu0 0
        %491 = vmatpush2.bf16.msra.mxu0 0
        %492 = vmatprep.mubr.bf16.mxu0 0
        %493 = vmatmul.mubr.bf16.gmra.mxu0 %v443
        %v494 = vpop.f32.mrf.mxu0
        %v495 = vadd.f32 0.0, %v494
        %v496 = vpop.f32.mrf.mxu0
        %v497 = vpop.f32.mrf.mxu0
        %v498 = vadd.f32 0.0, %v497
        %v499 = vpop.f32.mrf.mxu0
        %500 = vmatprep.mubr.bf16.mxu0 0
        %501 = vmatmul.mubr.bf16.gmra.mxu0 %v446
        %v502 = vpop.f32.mrf.mxu0
        %v503 = vadd.f32 0.0, %v502
        %v504 = vpop.f32.mrf.mxu0
        %v505 = vpop.f32.mrf.mxu0
        %v506 = vadd.f32 0.0, %v505
        %v507 = vpop.f32.mrf.mxu0
        %508 = vmatprep.mubr.bf16.mxu0 0
        %509 = vmatmul.mubr.bf16.gmra.mxu0 %v449
        %v510 = vpop.f32.mrf.mxu0
        %v511 = vadd.f32 0.0, %v510
        %v512 = vpop.f32.mrf.mxu0
        %v513 = vpop.f32.mrf.mxu0
        %v514 = vadd.f32 0.0, %v513
        %v515 = vpop.f32.mrf.mxu0
        %516 = vmatprep.mubr.bf16.mxu0 0
        %517 = vmatmul.mubr.bf16.gmra.mxu0 %v452
        %v518 = vpop.f32.mrf.mxu0
        %v519 = vadd.f32 0.0, %v518
        %v520 = vpop.f32.mrf.mxu0
        %v521 = vpop.f32.mrf.mxu0
        %v522 = vadd.f32 0.0, %v521
        %v523 = vpop.f32.mrf.mxu0
        %524 = vmatprep.mubr.bf16.mxu0 0
        %525 = vmatmul.mubr.bf16.gmra.mxu0 %v455
        %v526 = vpop.f32.mrf.mxu0
        %v527 = vadd.f32 0.0, %v526
        %v528 = vpop.f32.mrf.mxu0
        %v529 = vpop.f32.mrf.mxu0
        %v530 = vpop.f32.mrf.mxu0
        %531 = vdwg.mxu0
        %532 = vxpose.xlu0.b32.start [1/16] %v495, 128
        %533 = vxpose.xlu0.b32.cont [2/16] 0.0, 128
        %534 = vxpose.xlu0.b32.cont [3/16] 0.0, 128
        %535 = vxpose.xlu0.b32.cont [4/16] 0.0, 128
        %536 = vxpose.xlu0.b32.cont [5/16] 0.0, 128
        %537 = vxpose.xlu0.b32.cont [6/16] 0.0, 128
        %538 = vxpose.xlu0.b32.cont [7/16] 0.0, 128
        %539 = vxpose.xlu0.b32.cont [8/16] 0.0, 128
        %540 = vxpose.xlu0.b32.cont [9/16] 0.0, 128
        %541 = vxpose.xlu0.b32.cont [10/16] 0.0, 128
        %542 = vxpose.xlu0.b32.cont [11/16] 0.0, 128
        %543 = vxpose.xlu0.b32.cont [12/16] 0.0, 128
        %544 = vxpose.xlu0.b32.cont [13/16] 0.0, 128
        %545 = vxpose.xlu0.b32.cont [14/16] 0.0, 128
        %546 = vxpose.xlu0.b32.cont [15/16] 0.0, 128
        %547 = vxpose.xlu0.b32.end [16/16] 0.0, 128
        %v548 = vpop.trf.xlu0
        %v549 = vpop.trf.xlu0
        %v550 = vpop.trf.xlu0
        %v551 = vpop.trf.xlu0
        %v552 = vpop.trf.xlu0
        %v553 = vpop.trf.xlu0
        %v554 = vpop.trf.xlu0
        %v555 = vpop.trf.xlu0
        %v556 = vpop.trf.xlu0
        %v557 = vpop.trf.xlu0
        %v558 = vpop.trf.xlu0
        %v559 = vpop.trf.xlu0
        %v560 = vpop.trf.xlu0
        %v561 = vpop.trf.xlu0
        %v562 = vpop.trf.xlu0
        %v563 = vpop.trf.xlu0
        %v564 = vpack.c.bf16 %v549, %v548
        %v565 = vpack.c.bf16 %v551, %v550
        %v566 = vpack.c.bf16 %v553, %v552
        %v567 = vpack.c.bf16 %v555, %v554
        %v568 = vpack.c.bf16 %v557, %v556
        %v569 = vpack.c.bf16 %v559, %v558
        %v570 = vpack.c.bf16 %v561, %v560
        %v571 = vpack.c.bf16 %v563, %v562
        %vm572 = vcmask 64512
        %v574 = vsel %vm572, %v564, 0
        %v577 = vsel %vm572, %v565, 0
        %v580 = vsel %vm572, %v566, 0
        %v583 = vsel %vm572, %v567, 0
        %v586 = vsel %vm572, %v568, 0
        %v589 = vsel %vm572, %v569, 0
        %v592 = vsel %vm572, %v570, 0
        %v595 = vsel %vm572, %v571, 0
        %vm597 = vcmask 1043456
        %v599 = vsel %vm597, %v397, 0
        %v602 = vsel %vm597, %v398, 0
        %604 = vmatprep.subr.bf16.mxu0 0
        %605 = vmatpush1.bf16.msra.mxu0 0
        %606 = vmatprep.subr.bf16.mxu0 0
        %607 = vmatpush1.bf16.msra.mxu0 0
        %608 = vmatprep.subr.bf16.mxu0 0
        %609 = vmatpush1.bf16.msra.mxu0 0
        %610 = vmatprep.subr.bf16.mxu0 0
        %611 = vmatpush1.bf16.msra.mxu0 0
        %612 = vmatprep.subr.bf16.mxu0 0
        %613 = vmatpush1.bf16.msra.mxu0 0
        %614 = vmatprep.subr.bf16.mxu0 0
        %615 = vmatpush1.bf16.msra.mxu0 0
        %616 = vmatprep.subr.bf16.mxu0 0
        %617 = vmatpush1.bf16.msra.mxu0 0
        %618 = vmatprep.subr.bf16.mxu0 %v602
        %619 = vmatpush1.bf16.msra.mxu0 %v599
        %620 = vmatprep.subr.bf16.mxu0 0
        %621 = vmatpush2.bf16.msra.mxu0 0
        %622 = vmatprep.subr.bf16.mxu0 0
        %623 = vmatpush2.bf16.msra.mxu0 0
        %624 = vmatprep.subr.bf16.mxu0 0
        %625 = vmatpush2.bf16.msra.mxu0 0
        %626 = vmatprep.subr.bf16.mxu0 0
        %627 = vmatpush2.bf16.msra.mxu0 0
        %628 = vmatprep.subr.bf16.mxu0 0
        %629 = vmatpush2.bf16.msra.mxu0 0
        %630 = vmatprep.subr.bf16.mxu0 0
        %631 = vmatpush2.bf16.msra.mxu0 0
        %632 = vmatprep.subr.bf16.mxu0 0
        %633 = vmatpush2.bf16.msra.mxu0 0
        %634 = vmatprep.subr.bf16.mxu0 0
        %635 = vmatpush2.bf16.msra.mxu0 0
        %636 = vmatprep.mubr.bf16.mxu0 0
        %637 = vmatmul.mubr.bf16.gmra.mxu0 %v574
        %v638 = vpop.f32.mrf.mxu0
        %v639 = vadd.f32 0.0, %v638
        %v640 = vpop.f32.mrf.mxu0
        %v641 = vadd.f32 0.0, %v640
        %v642 = vpop.f32.mrf.mxu0
        %v643 = vadd.f32 0.0, %v642
        %v644 = vpop.f32.mrf.mxu0
        %v645 = vadd.f32 0.0, %v644
        %646 = vmatprep.mubr.bf16.mxu0 0
        %647 = vmatmul.mubr.bf16.gmra.mxu0 %v577
        %v648 = vpop.f32.mrf.mxu0
        %v649 = vadd.f32 0.0, %v648
        %v650 = vpop.f32.mrf.mxu0
        %v651 = vadd.f32 0.0, %v650
        %v652 = vpop.f32.mrf.mxu0
        %v653 = vadd.f32 0.0, %v652
        %v654 = vpop.f32.mrf.mxu0
        %v655 = vadd.f32 0.0, %v654
        %656 = vmatprep.mubr.bf16.mxu0 0
        %657 = vmatmul.mubr.bf16.gmra.mxu0 %v580
        %v658 = vpop.f32.mrf.mxu0
        %v659 = vadd.f32 0.0, %v658
        %v660 = vpop.f32.mrf.mxu0
        %v661 = vadd.f32 0.0, %v660
        %v662 = vpop.f32.mrf.mxu0
        %v663 = vadd.f32 0.0, %v662
        %v664 = vpop.f32.mrf.mxu0
        %v665 = vadd.f32 0.0, %v664
        %666 = vmatprep.mubr.bf16.mxu0 0
        %667 = vmatmul.mubr.bf16.gmra.mxu0 %v583
        %v668 = vpop.f32.mrf.mxu0
        %v669 = vadd.f32 0.0, %v668
        %v670 = vpop.f32.mrf.mxu0
        %v671 = vadd.f32 0.0, %v670
        %v672 = vpop.f32.mrf.mxu0
        %v673 = vadd.f32 0.0, %v672
        %v674 = vpop.f32.mrf.mxu0
        %v675 = vadd.f32 0.0, %v674
        %676 = vmatprep.mubr.bf16.mxu0 0
        %677 = vmatmul.mubr.bf16.gmra.mxu0 %v586
        %v678 = vpop.f32.mrf.mxu0
        %v679 = vadd.f32 0.0, %v678
        %v680 = vpop.f32.mrf.mxu0
        %v681 = vadd.f32 0.0, %v680
        %v682 = vpop.f32.mrf.mxu0
        %v683 = vadd.f32 0.0, %v682
        %v684 = vpop.f32.mrf.mxu0
        %v685 = vadd.f32 0.0, %v684
        %686 = vmatprep.mubr.bf16.mxu0 0
        %687 = vmatmul.mubr.bf16.gmra.mxu0 %v589
        %v688 = vpop.f32.mrf.mxu0
        %v689 = vadd.f32 0.0, %v688
        %v690 = vpop.f32.mrf.mxu0
        %v691 = vadd.f32 0.0, %v690
        %v692 = vpop.f32.mrf.mxu0
        %v693 = vadd.f32 0.0, %v692
        %v694 = vpop.f32.mrf.mxu0
        %v695 = vadd.f32 0.0, %v694
        %696 = vmatprep.mubr.bf16.mxu0 0
        %697 = vmatmul.mubr.bf16.gmra.mxu0 %v592
        %v698 = vpop.f32.mrf.mxu0
        %v699 = vadd.f32 0.0, %v698
        %v700 = vpop.f32.mrf.mxu0
        %v701 = vadd.f32 0.0, %v700
        %v702 = vpop.f32.mrf.mxu0
        %v703 = vadd.f32 0.0, %v702
        %v704 = vpop.f32.mrf.mxu0
        %v705 = vadd.f32 0.0, %v704
        %706 = vmatprep.mubr.bf16.mxu0 0
        %707 = vmatmul.mubr.bf16.gmra.mxu0 %v595
        %v708 = vpop.f32.mrf.mxu0
        %v709 = vadd.f32 0.0, %v708
        %v710 = vpop.f32.mrf.mxu0
        %v711 = vadd.f32 0.0, %v710
        %v712 = vpop.f32.mrf.mxu0
        %v713 = vadd.f32 0.0, %v712
        %v714 = vpop.f32.mrf.mxu0
        %v715 = vadd.f32 0.0, %v714
        %716 = vdwg.mxu0
        %v717 = vmax.f32 %v639, %v641
        %718 = vmax.xlane.f32.xlu0 %v717
        %v719 = vpop.xlane.xlu0 %718
        %v720 = vmax.f32 %v643, %v645
        %721 = vmax.xlane.f32.xlu0 %v720
        %v722 = vpop.xlane.xlu0 %721
        %v723 = vmax.f32 %v649, %v651
        %724 = vmax.xlane.f32.xlu0 %v723
        %v725 = vpop.xlane.xlu0 %724
        %v726 = vmax.f32 %v653, %v655
        %727 = vmax.xlane.f32.xlu0 %v726
        %v728 = vpop.xlane.xlu0 %727
        %v729 = vmax.f32 %v659, %v661
        %730 = vmax.xlane.f32.xlu0 %v729
        %v731 = vpop.xlane.xlu0 %730
        %v732 = vmax.f32 %v663, %v665
        %733 = vmax.xlane.f32.xlu0 %v732
        %v734 = vpop.xlane.xlu0 %733
        %v735 = vmax.f32 %v669, %v671
        %736 = vmax.xlane.f32.xlu0 %v735
        %v737 = vpop.xlane.xlu0 %736
        %v738 = vmax.f32 %v673, %v675
        %739 = vmax.xlane.f32.xlu0 %v738
        %v740 = vpop.xlane.xlu0 %739
        %v741 = vmax.f32 %v679, %v681
        %742 = vmax.xlane.f32.xlu0 %v741
        %v743 = vpop.xlane.xlu0 %742
        %v744 = vmax.f32 %v683, %v685
        %745 = vmax.xlane.f32.xlu0 %v744
        %v746 = vpop.xlane.xlu0 %745
        %v747 = vmax.f32 %v689, %v691
        %748 = vmax.xlane.f32.xlu0 %v747
        %v749 = vpop.xlane.xlu0 %748
        %v750 = vmax.f32 %v693, %v695
        %751 = vmax.xlane.f32.xlu0 %v750
        %v752 = vpop.xlane.xlu0 %751
        %v753 = vmax.f32 %v699, %v701
        %754 = vmax.xlane.f32.xlu0 %v753
        %v755 = vpop.xlane.xlu0 %754
        %v756 = vmax.f32 %v703, %v705
        %757 = vmax.xlane.f32.xlu0 %v756
        %v758 = vpop.xlane.xlu0 %757
        %v759 = vmax.f32 %v709, %v711
        %760 = vmax.xlane.f32.xlu0 %v759
        %v761 = vpop.xlane.xlu0 %760
        %v762 = vmax.f32 %v713, %v715
        %763 = vmax.xlane.f32.xlu0 %v762
        %v764 = vpop.xlane.xlu0 %763
        %v765 = vsub.f32 %v639, %v719
        %v766 = vsub.f32 %v641, %v719
        %v767 = vsub.f32 %v643, %v722
        %v768 = vsub.f32 %v645, %v722
        %v769 = vsub.f32 %v649, %v725
        %v770 = vsub.f32 %v651, %v725
        %v771 = vsub.f32 %v653, %v728
        %v772 = vsub.f32 %v655, %v728
        %v773 = vsub.f32 %v659, %v731
        %v774 = vsub.f32 %v661, %v731
        %v775 = vsub.f32 %v663, %v734
        %v776 = vsub.f32 %v665, %v734
        %v777 = vsub.f32 %v669, %v737
        %v778 = vsub.f32 %v671, %v737
        %v779 = vsub.f32 %v673, %v740
        %v780 = vsub.f32 %v675, %v740
        %v781 = vsub.f32 %v679, %v743
        %v782 = vsub.f32 %v681, %v743
        %v783 = vsub.f32 %v683, %v746
        %v784 = vsub.f32 %v685, %v746
        %v785 = vsub.f32 %v689, %v749
        %v786 = vsub.f32 %v691, %v749
        %v787 = vsub.f32 %v693, %v752
        %v788 = vsub.f32 %v695, %v752
        %v789 = vsub.f32 %v699, %v755
        %v790 = vsub.f32 %v701, %v755
        %v791 = vsub.f32 %v703, %v758
        %v792 = vsub.f32 %v705, %v758
        %v793 = vsub.f32 %v709, %v761
        %v794 = vsub.f32 %v711, %v761
        %v795 = vsub.f32 %v713, %v764
        %v796 = vsub.f32 %v715, %v764
        %v797 = vmul.f32 %v765, 1.442695
        %v798 = vpow.pop %v797
        %v799 = vmul.f32 %v766, 1.442695
        %v800 = vpow.pop %v799
        %v801 = vmul.f32 %v767, 1.442695
        %v802 = vpow.pop %v801
        %v803 = vmul.f32 %v768, 1.442695
        %v804 = vpow.pop %v803
        %v805 = vmul.f32 %v769, 1.442695
        %v806 = vpow.pop %v805
        %v807 = vmul.f32 %v770, 1.442695
        %v808 = vpow.pop %v807
        %v809 = vmul.f32 %v771, 1.442695
        %v810 = vpow.pop %v809
        %v811 = vmul.f32 %v772, 1.442695
        %v812 = vpow.pop %v811
        %v813 = vmul.f32 %v773, 1.442695
        %v814 = vpow.pop %v813
        %v815 = vmul.f32 %v774, 1.442695
        %v816 = vpow.pop %v815
        %v817 = vmul.f32 %v775, 1.442695
        %v818 = vpow.pop %v817
        %v819 = vmul.f32 %v776, 1.442695
        %v820 = vpow.pop %v819
        %v821 = vmul.f32 %v777, 1.442695
        %v822 = vpow.pop %v821
        %v823 = vmul.f32 %v778, 1.442695
        %v824 = vpow.pop %v823
        %v825 = vmul.f32 %v779, 1.442695
        %v826 = vpow.pop %v825
        %v827 = vmul.f32 %v780, 1.442695
        %v828 = vpow.pop %v827
        %v829 = vmul.f32 %v781, 1.442695
        %v830 = vpow.pop %v829
        %v831 = vmul.f32 %v782, 1.442695
        %v832 = vpow.pop %v831
        %v833 = vmul.f32 %v783, 1.442695
        %v834 = vpow.pop %v833
        %v835 = vmul.f32 %v784, 1.442695
        %v836 = vpow.pop %v835
        %v837 = vmul.f32 %v785, 1.442695
        %v838 = vpow.pop %v837
        %v839 = vmul.f32 %v786, 1.442695
        %v840 = vpow.pop %v839
        %v841 = vmul.f32 %v787, 1.442695
        %v842 = vpow.pop %v841
        %v843 = vmul.f32 %v788, 1.442695
        %v844 = vpow.pop %v843
        %v845 = vmul.f32 %v789, 1.442695
        %v846 = vpow.pop %v845
        %v847 = vmul.f32 %v790, 1.442695
        %v848 = vpow.pop %v847
        %v849 = vmul.f32 %v791, 1.442695
        %v850 = vpow.pop %v849
        %v851 = vmul.f32 %v792, 1.442695
        %v852 = vpow.pop %v851
        %v853 = vmul.f32 %v793, 1.442695
        %v854 = vpow.pop %v853
        %v855 = vmul.f32 %v794, 1.442695
        %v856 = vpow.pop %v855
        %v857 = vmul.f32 %v795, 1.442695
        %v858 = vpow.pop %v857
        %v859 = vmul.f32 %v796, 1.442695
        %v860 = vpow.pop %v859
        %v861 = vadd.f32 %v798, %v800
        %862 = vadd.xlane.f32.xlu0 %v861
        %v863 = vpop.xlane.xlu0 %862
        %v864 = vadd.f32 %v802, %v804
        %865 = vadd.xlane.f32.xlu0 %v864
        %v866 = vpop.xlane.xlu0 %865
        %v867 = vadd.f32 %v806, %v808
        %868 = vadd.xlane.f32.xlu0 %v867
        %v869 = vpop.xlane.xlu0 %868
        %v870 = vadd.f32 %v810, %v812
        %871 = vadd.xlane.f32.xlu0 %v870
        %v872 = vpop.xlane.xlu0 %871
        %v873 = vadd.f32 %v814, %v816
        %874 = vadd.xlane.f32.xlu0 %v873
        %v875 = vpop.xlane.xlu0 %874
        %v876 = vadd.f32 %v818, %v820
        %877 = vadd.xlane.f32.xlu0 %v876
        %v878 = vpop.xlane.xlu0 %877
        %v879 = vadd.f32 %v822, %v824
        %880 = vadd.xlane.f32.xlu0 %v879
        %v881 = vpop.xlane.xlu0 %880
        %v882 = vadd.f32 %v826, %v828
        %883 = vadd.xlane.f32.xlu0 %v882
        %v884 = vpop.xlane.xlu0 %883
        %v885 = vadd.f32 %v830, %v832
        %886 = vadd.xlane.f32.xlu0 %v885
        %v887 = vpop.xlane.xlu0 %886
        %v888 = vadd.f32 %v834, %v836
        %889 = vadd.xlane.f32.xlu0 %v888
        %v890 = vpop.xlane.xlu0 %889
        %v891 = vadd.f32 %v838, %v840
        %892 = vadd.xlane.f32.xlu0 %v891
        %v893 = vpop.xlane.xlu0 %892
        %v894 = vadd.f32 %v842, %v844
        %895 = vadd.xlane.f32.xlu0 %v894
        %v896 = vpop.xlane.xlu0 %895
        %v897 = vadd.f32 %v846, %v848
        %898 = vadd.xlane.f32.xlu0 %v897
        %v899 = vpop.xlane.xlu0 %898
        %v900 = vadd.f32 %v850, %v852
        %901 = vadd.xlane.f32.xlu0 %v900
        %v902 = vpop.xlane.xlu0 %901
        %v903 = vadd.f32 %v854, %v856
        %904 = vadd.xlane.f32.xlu0 %v903
        %v905 = vpop.xlane.xlu0 %904
        %v906 = vadd.f32 %v858, %v860
        %907 = vadd.xlane.f32.xlu0 %v906
        %v908 = vpop.xlane.xlu0 %907
        %v909 = vpack.c.bf16 %v802, %v798
        %v910 = vpack.c.bf16 %v804, %v800
        %v911 = vpack.c.bf16 %v810, %v806
        %v912 = vpack.c.bf16 %v812, %v808
        %v913 = vpack.c.bf16 %v818, %v814
        %v914 = vpack.c.bf16 %v820, %v816
        %v915 = vpack.c.bf16 %v826, %v822
        %v916 = vpack.c.bf16 %v828, %v824
        %v917 = vpack.c.bf16 %v834, %v830
        %v918 = vpack.c.bf16 %v836, %v832
        %v919 = vpack.c.bf16 %v842, %v838
        %v920 = vpack.c.bf16 %v844, %v840
        %v921 = vpack.c.bf16 %v850, %v846
        %v922 = vpack.c.bf16 %v852, %v848
        %v923 = vpack.c.bf16 %v858, %v854
        %v924 = vpack.c.bf16 %v860, %v856
        %925 = vmatprep.subr.bf16.mxu0 0
        %926 = vmatpush1.bf16.xpose.msra.mxu0 0
        %927 = vmatprep.subr.bf16.mxu0 0
        %928 = vmatpush1.bf16.xpose.msra.mxu0 0
        %929 = vmatprep.subr.bf16.mxu0 0
        %930 = vmatpush1.bf16.xpose.msra.mxu0 0
        %931 = vmatprep.subr.bf16.mxu0 0
        %932 = vmatpush1.bf16.xpose.msra.mxu0 0
        %933 = vmatprep.subr.bf16.mxu0 0
        %934 = vmatpush1.bf16.xpose.msra.mxu0 0
        %935 = vmatprep.subr.bf16.mxu0 0
        %936 = vmatpush1.bf16.xpose.msra.mxu0 0
        %937 = vmatprep.subr.bf16.mxu0 0
        %938 = vmatpush1.bf16.xpose.msra.mxu0 0
        %939 = vmatprep.subr.bf16.mxu0 %v400
        %940 = vmatpush1.bf16.xpose.msra.mxu0 %v399
        %941 = vmatprep.subr.bf16.mxu0 0
        %942 = vmatpush2.bf16.xpose.msra.mxu0 0
        %943 = vmatprep.subr.bf16.mxu0 0
        %944 = vmatpush2.bf16.xpose.msra.mxu0 0
        %945 = vmatprep.subr.bf16.mxu0 0
        %946 = vmatpush2.bf16.xpose.msra.mxu0 0
        %947 = vmatprep.subr.bf16.mxu0 0
        %948 = vmatpush2.bf16.xpose.msra.mxu0 0
        %949 = vmatprep.subr.bf16.mxu0 0
        %950 = vmatpush2.bf16.xpose.msra.mxu0 0
        %951 = vmatprep.subr.bf16.mxu0 0
        %952 = vmatpush2.bf16.xpose.msra.mxu0 0
        %953 = vmatprep.subr.bf16.mxu0 0
        %954 = vmatpush2.bf16.xpose.msra.mxu0 0
        %955 = vmatprep.subr.bf16.mxu0 0
        %956 = vmatpush2.bf16.xpose.msra.mxu0 0
        %957 = vmatprep.mubr.bf16.mxu0 %v910
        %958 = vmatmul.mubr.bf16.gmra.mxu0 %v909
        %v959 = vpop.f32.mrf.mxu0
        %v960 = vadd.f32 0.0, %v959
        %v961 = vpop.f32.mrf.mxu0
        %v962 = vpop.f32.mrf.mxu0
        %v963 = vadd.f32 0.0, %v962
        %v964 = vpop.f32.mrf.mxu0
        %965 = vmatprep.mubr.bf16.mxu0 %v912
        %966 = vmatmul.mubr.bf16.gmra.mxu0 %v911
        %v967 = vpop.f32.mrf.mxu0
        %v968 = vadd.f32 0.0, %v967
        %v969 = vpop.f32.mrf.mxu0
        %v970 = vpop.f32.mrf.mxu0
        %v971 = vadd.f32 0.0, %v970
        %v972 = vpop.f32.mrf.mxu0
        %973 = vmatprep.mubr.bf16.mxu0 %v914
        %974 = vmatmul.mubr.bf16.gmra.mxu0 %v913
        %v975 = vpop.f32.mrf.mxu0
        %v976 = vadd.f32 0.0, %v975
        %v977 = vpop.f32.mrf.mxu0
        %v978 = vpop.f32.mrf.mxu0
        %v979 = vadd.f32 0.0, %v978
        %v980 = vpop.f32.mrf.mxu0
        %981 = vmatprep.mubr.bf16.mxu0 %v916
        %982 = vmatmul.mubr.bf16.gmra.mxu0 %v915
        %v983 = vpop.f32.mrf.mxu0
        %v984 = vadd.f32 0.0, %v983
        %v985 = vpop.f32.mrf.mxu0
        %v986 = vpop.f32.mrf.mxu0
        %v987 = vadd.f32 0.0, %v986
        %v988 = vpop.f32.mrf.mxu0
        %989 = vmatprep.mubr.bf16.mxu0 %v918
        %990 = vmatmul.mubr.bf16.gmra.mxu0 %v917
        %v991 = vpop.f32.mrf.mxu0
        %v992 = vadd.f32 0.0, %v991
        %v993 = vpop.f32.mrf.mxu0
        %v994 = vpop.f32.mrf.mxu0
        %v995 = vadd.f32 0.0, %v994
        %v996 = vpop.f32.mrf.mxu0
        %997 = vmatprep.mubr.bf16.mxu0 %v920
        %998 = vmatmul.mubr.bf16.gmra.mxu0 %v919
        %v999 = vpop.f32.mrf.mxu0
        %v1000 = vadd.f32 0.0, %v999
        %v1001 = vpop.f32.mrf.mxu0
        %v1002 = vpop.f32.mrf.mxu0
        %v1003 = vadd.f32 0.0, %v1002
        %v1004 = vpop.f32.mrf.mxu0
        %1005 = vmatprep.mubr.bf16.mxu0 %v922
        %1006 = vmatmul.mubr.bf16.gmra.mxu0 %v921
        %v1007 = vpop.f32.mrf.mxu0
        %v1008 = vadd.f32 0.0, %v1007
        %v1009 = vpop.f32.mrf.mxu0
        %v1010 = vpop.f32.mrf.mxu0
        %v1011 = vadd.f32 0.0, %v1010
        %v1012 = vpop.f32.mrf.mxu0
        %1013 = vmatprep.mubr.bf16.mxu0 %v924
        %1014 = vmatmul.mubr.bf16.gmra.mxu0 %v923
        %v1015 = vpop.f32.mrf.mxu0
        %v1016 = vadd.f32 0.0, %v1015
        %v1017 = vpop.f32.mrf.mxu0
        %v1018 = vpop.f32.mrf.mxu0
        %v1019 = vadd.f32 0.0, %v1018
        %v1020 = vpop.f32.mrf.mxu0
        %1021 = vdwg.mxu0
        %v1022 = vrcp.pop %v863
        %v1023 = vrcp.pop %v866
        %v1024 = vrcp.pop %v869
        %v1025 = vrcp.pop %v872
        %v1026 = vrcp.pop %v875
        %v1027 = vrcp.pop %v878
        %v1028 = vrcp.pop %v881
        %v1029 = vrcp.pop %v884
        %v1030 = vrcp.pop %v887
        %v1031 = vrcp.pop %v890
        %v1032 = vrcp.pop %v893
        %v1033 = vrcp.pop %v896
        %v1034 = vrcp.pop %v899
        %v1035 = vrcp.pop %v902
        %v1036 = vrcp.pop %v905
        %v1037 = vrcp.pop %v908
        %v1038 = vmul.f32 %v960, %v1022
        %v1039 = vmul.f32 %v963, %v1023
        %v1040 = vmul.f32 %v968, %v1024
        %v1041 = vmul.f32 %v971, %v1025
        %v1042 = vmul.f32 %v976, %v1026
        %v1043 = vmul.f32 %v979, %v1027
        %v1044 = vmul.f32 %v984, %v1028
        %v1045 = vmul.f32 %v987, %v1029
        %v1046 = vmul.f32 %v992, %v1030
        %v1047 = vmul.f32 %v995, %v1031
        %v1048 = vmul.f32 %v1000, %v1032
        %v1049 = vmul.f32 %v1003, %v1033
        %v1050 = vmul.f32 %v1008, %v1034
        %v1051 = vmul.f32 %v1011, %v1035
        %v1052 = vmul.f32 %v1016, %v1036
        %v1053 = vmul.f32 %v1019, %v1037
        %v1054 = vld [vmem:[%s4] sm:$0xff]
        %v1055 = vld [vmem:[%s4 + $0x8] sm:$0xff]
        %v1056 = vld [vmem:[%s4 + $0x10] sm:$0xff]
        %v1057 = vld [vmem:[%s4 + $0x18] sm:$0xff]
        %v1058 = vld [vmem:[%s4 + $0x20] sm:$0xff]
        %v1059 = vld [vmem:[%s4 + $0x28] sm:$0xff]
        %v1060 = vld [vmem:[%s4 + $0x30] sm:$0xff]
        %v1061 = vld [vmem:[%s4 + $0x38] sm:$0xff]
        %v1063 = vsel %vm572, %v1054, 0
        %v1066 = vsel %vm572, %v1055, 0
        %v1069 = vsel %vm572, %v1056, 0
        %v1072 = vsel %vm572, %v1057, 0
        %v1075 = vsel %vm572, %v1058, 0
        %v1078 = vsel %vm572, %v1059, 0
        %v1081 = vsel %vm572, %v1060, 0
        %v1084 = vsel %vm572, %v1061, 0
        %v1087 = vsel %vm572, %v1038, 0
        %v1090 = vsel %vm572, %v1039, 0
        %v1093 = vsel %vm572, %v1040, 0
        %v1096 = vsel %vm572, %v1041, 0
        %v1099 = vsel %vm572, %v1042, 0
        %v1102 = vsel %vm572, %v1043, 0
        %v1105 = vsel %vm572, %v1044, 0
        %v1108 = vsel %vm572, %v1045, 0
        %v1111 = vsel %vm572, %v1046, 0
        %v1114 = vsel %vm572, %v1047, 0
        %v1117 = vsel %vm572, %v1048, 0
        %v1120 = vsel %vm572, %v1049, 0
        %v1123 = vsel %vm572, %v1050, 0
        %v1126 = vsel %vm572, %v1051, 0
        %v1129 = vsel %vm572, %v1052, 0
        %v1132 = vsel %vm572, %v1053, 0
        %1134 = vmatprep.subr.mxu0 0.0
        %1135 = vmatpush1.xpose.msra.mxu0 %v1132
        %1136 = vmatprep.subr.mxu0 0.0
        %1137 = vmatpush1.xpose.msra.mxu0 %v1129
        %1138 = vmatprep.subr.mxu0 0.0
        %1139 = vmatpush1.xpose.msra.mxu0 %v1126
        %1140 = vmatprep.subr.mxu0 0.0
        %1141 = vmatpush1.xpose.msra.mxu0 %v1123
        %1142 = vmatprep.subr.mxu0 0.0
        %1143 = vmatpush1.xpose.msra.mxu0 %v1120
        %1144 = vmatprep.subr.mxu0 0.0
        %1145 = vmatpush1.xpose.msra.mxu0 %v1117
        %1146 = vmatprep.subr.mxu0 0.0
        %1147 = vmatpush1.xpose.msra.mxu0 %v1114
        %1148 = vmatprep.subr.mxu0 0.0
        %1149 = vmatpush1.xpose.msra.mxu0 %v1111
        %1150 = vmatprep.subr.mxu0 0.0
        %1151 = vmatpush1.xpose.msra.mxu0 %v1108
        %1152 = vmatprep.subr.mxu0 0.0
        %1153 = vmatpush1.xpose.msra.mxu0 %v1105
        %1154 = vmatprep.subr.mxu0 0.0
        %1155 = vmatpush1.xpose.msra.mxu0 %v1102
        %1156 = vmatprep.subr.mxu0 0.0
        %1157 = vmatpush1.xpose.msra.mxu0 %v1099
        %1158 = vmatprep.subr.mxu0 0.0
        %1159 = vmatpush1.xpose.msra.mxu0 %v1096
        %1160 = vmatprep.subr.mxu0 0.0
        %1161 = vmatpush1.xpose.msra.mxu0 %v1093
        %1162 = vmatprep.subr.mxu0 0.0
        %1163 = vmatpush1.xpose.msra.mxu0 %v1090
        %1164 = vmatprep.subr.mxu0 0.0
        %1165 = vmatpush1.xpose.msra.mxu0 %v1087
        %1166 = vmatprep.subr.mxu0 0.0
        %1167 = vmatpush2.xpose.msra.mxu0 0.0
        %1168 = vmatprep.subr.mxu0 0.0
        %1169 = vmatpush2.xpose.msra.mxu0 0.0
        %1170 = vmatprep.subr.mxu0 0.0
        %1171 = vmatpush2.xpose.msra.mxu0 0.0
        %1172 = vmatprep.subr.mxu0 0.0
        %1173 = vmatpush2.xpose.msra.mxu0 0.0
        %1174 = vmatprep.subr.mxu0 0.0
        %1175 = vmatpush2.xpose.msra.mxu0 0.0
        %1176 = vmatprep.subr.mxu0 0.0
        %1177 = vmatpush2.xpose.msra.mxu0 0.0
        %1178 = vmatprep.subr.mxu0 0.0
        %1179 = vmatpush2.xpose.msra.mxu0 0.0
        %1180 = vmatprep.subr.mxu0 0.0
        %1181 = vmatpush2.xpose.msra.mxu0 0.0
        %1182 = vmatprep.subr.mxu0 0.0
        %1183 = vmatpush2.xpose.msra.mxu0 0.0
        %1184 = vmatprep.subr.mxu0 0.0
        %1185 = vmatpush2.xpose.msra.mxu0 0.0
        %1186 = vmatprep.subr.mxu0 0.0
        %1187 = vmatpush2.xpose.msra.mxu0 0.0
        %1188 = vmatprep.subr.mxu0 0.0
        %1189 = vmatpush2.xpose.msra.mxu0 0.0
        %1190 = vmatprep.subr.mxu0 0.0
        %1191 = vmatpush2.xpose.msra.mxu0 0.0
        %1192 = vmatprep.subr.mxu0 0.0
        %1193 = vmatpush2.xpose.msra.mxu0 0.0
        %1194 = vmatprep.subr.mxu0 0.0
        %1195 = vmatpush2.xpose.msra.mxu0 0.0
        %1196 = vmatprep.subr.mxu0 0.0
        %1197 = vmatpush2.xpose.msra.mxu0 0.0
        %1198 = vmatprep.mubr.f32.mxu0 0.0
        %1199 = vmatmul.mubr.f32.gmra.mxu0 %v1063
        %v1200 = vpop.f32.mrf.mxu0
        %v1201 = vadd.f32 0.0, %v1200
        %v1202 = vpop.f32.mrf.mxu0
        %1203 = vmatprep.mubr.f32.mxu0 0.0
        %1204 = vmatmul.mubr.f32.gmra.mxu0 %v1066
        %v1205 = vpop.f32.mrf.mxu0
        %v1206 = vadd.f32 0.0, %v1205
        %v1207 = vpop.f32.mrf.mxu0
        %1208 = vmatprep.mubr.f32.mxu0 0.0
        %1209 = vmatmul.mubr.f32.gmra.mxu0 %v1069
        %v1210 = vpop.f32.mrf.mxu0
        %v1211 = vadd.f32 0.0, %v1210
        %v1212 = vpop.f32.mrf.mxu0
        %1213 = vmatprep.mubr.f32.mxu0 0.0
        %1214 = vmatmul.mubr.f32.gmra.mxu0 %v1072
        %v1215 = vpop.f32.mrf.mxu0
        %v1216 = vadd.f32 0.0, %v1215
        %v1217 = vpop.f32.mrf.mxu0
        %1218 = vmatprep.mubr.f32.mxu0 0.0
        %1219 = vmatmul.mubr.f32.gmra.mxu0 %v1075
        %v1220 = vpop.f32.mrf.mxu0
        %v1221 = vadd.f32 0.0, %v1220
        %v1222 = vpop.f32.mrf.mxu0
        %1223 = vmatprep.mubr.f32.mxu0 0.0
        %1224 = vmatmul.mubr.f32.gmra.mxu0 %v1078
        %v1225 = vpop.f32.mrf.mxu0
        %v1226 = vadd.f32 0.0, %v1225
        %v1227 = vpop.f32.mrf.mxu0
        %1228 = vmatprep.mubr.f32.mxu0 0.0
        %1229 = vmatmul.mubr.f32.gmra.mxu0 %v1081
        %v1230 = vpop.f32.mrf.mxu0
        %v1231 = vadd.f32 0.0, %v1230
        %v1232 = vpop.f32.mrf.mxu0
        %1233 = vmatprep.mubr.f32.mxu0 0.0
        %1234 = vmatmul.mubr.f32.gmra.mxu0 %v1084
        %v1235 = vpop.f32.mrf.mxu0
        %v1236 = vadd.f32 0.0, %v1235
        %v1237 = vpop.f32.mrf.mxu0
        %1238 = vdwg.mxu0
        %v1239 = vadd.f32 %v498, %v1201
        %v1240 = vadd.f32 %v503, %v1206
        %v1241 = vadd.f32 %v506, %v1211
        %v1242 = vadd.f32 %v511, %v1216
        %v1243 = vadd.f32 %v514, %v1221
        %v1244 = vadd.f32 %v519, %v1226
        %v1245 = vadd.f32 %v522, %v1231
        %v1246 = vadd.f32 %v527, %v1236
        %v1247 = vmax.f32 %v1239, 0.0
        %v1248 = vmax.f32 %v1240, 0.0
        %v1249 = vmax.f32 %v1241, 0.0
        %v1250 = vmax.f32 %v1242, 0.0
        %v1251 = vmax.f32 %v1243, 0.0
        %v1252 = vmax.f32 %v1244, 0.0
        %v1253 = vmax.f32 %v1245, 0.0
        %v1254 = vmax.f32 %v1246, 0.0
        %1255 = vst [vmem:[%s306] sm:$0xff] %v1247
        %1256 = vst [vmem:[%s306 + $0x8] sm:$0xff] %v1248
        %1257 = vst [vmem:[%s306 + $0x10] sm:$0xff] %v1249
        %1258 = vst [vmem:[%s306 + $0x18] sm:$0xff] %v1250
        %1259 = vst [vmem:[%s306 + $0x20] sm:$0xff] %v1251
        %1260 = vst [vmem:[%s306 + $0x28] sm:$0xff] %v1252
        %1261 = vst [vmem:[%s306 + $0x30] sm:$0xff] %v1253
        %1262 = vst [vmem:[%s306 + $0x38] sm:$0xff] %v1254
        %s1263 = sand.u32 %s158, 1
        %s1264 = scalar_lea.sflag [#allocation4], %s1263
        %s1265 = sand.u32 %s158, 1
        %s1266 = smul.addr %s1265, 64
        %s1267 = scalar_lea.vmem [#allocation3], %s1266
        // Predicated region
        $region82: #{tpu_custom_call.1} parent=76 // pred_check
          %p1268 = pneg %p168
        $region83: #{tpu_custom_call.1} parent=76 // pred_check_branch
          %1270 = sbr.rel (%p1268) target = $region85
        $region84: #{tpu_custom_call.1} parent=76 // pred_region
          %s1272 = ssub.s32 1024, 1024
          %1273 = vsyncadd %s1264, %s1272
          %s1274 = smul.addr %s23, 16
          %s1275 = sadd.s32 %s24, %s1274
          %s1276 = smul.addr %s1275, 128
          %s1277 = scalar_lea.hbm %s5, %s1276
          %s1278 = sshll.u32 %s1267, 4
          %s1279 = int_to_ptr.vmem [resolvable:$true] %s1278
          %1284 = dma.vmem_to_hbm [thread:$0]  %s1279, 1024, %s1277, %s1264, 128, 256, 8
        $region85: #{tpu_custom_call.1} parent=76 // pred_fallthru
          _
      $region77: #{tpu_custom_call.1} parent=5 // pred_fallthru
        _
      %p1285 = scmp.le.s32.totalorder 2, %s14
      // Predicated region
      $region86: #{tpu_custom_call.1} parent=5 // pred_check
        %p1286 = pneg %p1285
      $region87: #{tpu_custom_call.1} parent=5 // pred_check_branch
        %1288 = sbr.rel (%p1286) target = $region89
      $region88: #{tpu_custom_call.1} parent=5 // pred_region
        %s1289 = ssub.s32 %s14, 2
        // Predicated region
        $region90: #{tpu_custom_call.1} parent=88 // pred_check
          %p1290 = pneg %p174
        $region91: #{tpu_custom_call.1} parent=88 // pred_check_branch
          %1292 = sbr.rel (%p1290) target = $region93
        $region92: #{tpu_custom_call.1} parent=88 // pred_region
          %s1293 = sand.u32 %s159, 1
          %s1294 = scalar_lea.sflag [#allocation4], %s1293
          %s1295 = sand.u32 %s159, 1
          %s1296 = smul.addr %s1295, 64
          %s1297 = scalar_lea.vmem [#allocation3], %s1296
          %1298 = dma.done %s1294, 1024
        $region93: #{tpu_custom_call.1} parent=88 // pred_fallthru
          _
      $region89: #{tpu_custom_call.1} parent=5 // pred_fallthru
        _
    $region6: #{tpu_custom_call.1} parent=1 // loop_footer
      %s18 = sadd.s32 1, %s14
    $region7: #{tpu_custom_call.1} parent=1 // loop_footer_branch
      %13 = sbr.rel target = $region3
    $region8: #{tpu_custom_call.1} parent=1 // loop_exit
      _
    %1299 = vsyncpa [#allocation4], 1
    %s1300 = scalar_lea.sflag [#allocation4], 1
    %1301 = vsyncpa %s1300, 1

</llo_original>
